<compile_context>
chip_gen: v7x
topology: tpu7x:2x2x1
jax: 0.10.0
libtpu: 0.0.40
codegen_flags: <defaults>
</compile_context>

<pallas_src>
import functools
import math

import jax
import jax.numpy as jnp
from jax.experimental import pallas as pl
from jax.experimental.pallas import tpu as pltpu


def sru_kernel(x_ref, w_ref, b_ref, wg_ref, o_ref, *, eps, thresh):
    # x_ref: (Nb, G, L)   w_ref / b_ref / wg_ref: (G, L) f32   o_ref: (Nb, G, L)
    x = x_ref[...].astype(jnp.float32)                       # (Nb, G, L)
    L = x.shape[-1]

    # Two-pass per-group statistics over the lane axis (f32 accumulation).
    mean = jnp.sum(x, axis=2, keepdims=True) * (1.0 / L)     # (Nb, G, 1)
    xc = x - mean                                            # reused for gn
    var = jnp.sum(xc * xc, axis=2, keepdims=True) * (1.0 / (L - 1))  # ddof=1
    std = jnp.sqrt(var)
    rstd = 1.0 / (std + eps)                                 # tiny tensor: exact divide

    gn = xc * rstd * w_ref[...] + b_ref[...]                 # (Nb, G, L)

    # gate: sigmoid(gn * w_gamma) >= gate_threshold
    #   <=> gn * w_gamma >= logit(gate_threshold)   (sigmoid is monotone)
    cond = gn * wg_ref[...] >= thresh

    # reconstruct: channel-half cross add == group-half cross add (C % G == 0,
    # G even, so the split aligns with whole groups / whole 8-sublane tiles).
    # Build the swapped "non-info" contribution and emit one full-block store.
    h = gn.shape[1] // 2
    keep = jnp.where(cond, gn, 0.0)                          # info_mask * gn
    drop = jnp.where(cond, 0.0, gn)                          # noninfo_mask * gn
    drop_sw = jnp.concatenate([drop[:, h:], drop[:, :h]], axis=1)  # half swap (aligned)
    o_ref[...] = (keep + drop_sw).astype(o_ref.dtype)


def _vmem_capacity_bytes():
    try:
        return int(pltpu.get_tpu_info().vmem_capacity_bytes)
    except Exception:
        return 128 << 20  # conservative default (v5e/v6e-like)


def _largest_divisor_leq(n, cap):
    cap = max(1, int(cap))
    best = 1
    d = 1
    while d * d <= n:
        if n % d == 0:
            for v in (d, n // d):
                if v <= cap and v > best:
                    best = v
        d += 1
    return best


def sru_forward(x, weight, bias, *, group_num=16, gate_threshold=0.5, eps=1e-10):
    N, C, H, W = x.shape
    G = group_num
    assert C >= G and C % G == 0 and G % 2 == 0
    cpg = C // G
    L = cpg * H * W
    assert L > 1

    xg = x.reshape(N, G, L)

    # Per-channel params broadcast once to the grouped (G, L) layout (f32 glue).
    w_c = weight.reshape(C).astype(jnp.float32)
    b_c = bias.reshape(C).astype(jnp.float32)

    def to_grouped(p):
        return jnp.broadcast_to(p.reshape(G, cpg, 1), (G, cpg, H * W)).reshape(G, L)

    w_g = to_grouped(w_c)
    b_g = to_grouped(b_c)
    wg_g = to_grouped(w_c / jnp.sum(w_c))       # w_gamma, 1/sum(w) folded in glue

    # sigmoid(z) >= gate  <=>  z >= logit(gate)  (exact for 0 < gate < 1)
    if gate_threshold <= 0.0:
        thresh = -float("inf")
    elif gate_threshold >= 1.0:
        thresh = float("inf")
    else:
        thresh = math.log(gate_threshold / (1.0 - gate_threshold))

    # ---- device-aware block sizing (no padding: nb divides N exactly) ----
    elem = jnp.dtype(x.dtype).itemsize
    bytes_per_n = G * L * elem

    small_vmem = _vmem_capacity_bytes() <= (64 << 20)   # v7x-like (64 MiB/TC, 2 TCs)
    target = (5 << 19) if small_vmem else (6 << 20)     # ~2.5 MiB vs ~6 MiB x-blocks

    max_nb = max(1, target // max(bytes_per_n, 1))
    nb = _largest_divisor_leq(N, max_nb)
    if small_vmem and N >= 2 and N // nb < 2:
        # dual-TensorCore part: keep >= 2 grid steps so both cores get work
        nb = _largest_divisor_leq(N, N // 2)
    grid_n = N // nb

    # VMEM budget: double-buffered in/out blocks, f32 in-kernel temporaries,
    # three resident (G, L) param tiles, plus headroom; capped per device.
    block_bytes = nb * bytes_per_n
    block_f32 = nb * G * L * 4
    param_bytes = 3 * G * L * 4
    cap = (40 << 20) if small_vmem else (96 << 20)
    vmem_limit = int(min(cap, max(16 << 20,
                                  4 * block_bytes + 6 * block_f32
                                  + 2 * param_bytes + (2 << 20))))

    kernel = functools.partial(sru_kernel, eps=eps, thresh=thresh)
    out = pl.pallas_call(
        kernel,
        out_shape=jax.ShapeDtypeStruct((N, G, L), x.dtype),
        grid_spec=pltpu.PrefetchScalarGridSpec(
            num_scalar_prefetch=0,
            grid=(grid_n,),
            in_specs=[
                pl.BlockSpec((nb, G, L), lambda n: (n, 0, 0)),
                pl.BlockSpec((G, L), lambda n: (0, 0)),   # weight (resident)
                pl.BlockSpec((G, L), lambda n: (0, 0)),   # bias   (resident)
                pl.BlockSpec((G, L), lambda n: (0, 0)),   # w_gamma (resident)
            ],
            out_specs=pl.BlockSpec((nb, G, L), lambda n: (n, 0, 0)),
        ),
        compiler_params=pltpu.CompilerParams(
            dimension_semantics=("parallel",),
            vmem_limit_bytes=vmem_limit,
        ),
    )(xg, w_g, b_g, wg_g)

    return out.reshape(N, C, H, W)


def sru_reference(x, weight, bias, *, group_num=16, gate_threshold=0.5, eps=1e-10):
    # Pure-JAX mirror of the PyTorch forward (for correctness checking).
    N, C, H, W = x.shape
    xg = x.reshape(N, group_num, -1)
    mean = jnp.mean(xg, axis=2, keepdims=True)
    std = jnp.std(xg, axis=2, keepdims=True, ddof=1)
    xn = ((xg - mean) / (std + eps)).reshape(N, C, H, W)
    w = weight.reshape(1, C, 1, 1)
    b = bias.reshape(1, C, 1, 1)
    gn_x = xn * w + b
    w_gamma = (weight.reshape(C) / jnp.sum(weight)).reshape(1, C, 1, 1)
    rew = jax.nn.sigmoid(gn_x * w_gamma)
    info = (rew >= gate_threshold).astype(x.dtype)
    x1 = info * gn_x
    x2 = (1.0 - info) * gn_x
    h = C // 2
    return jnp.concatenate([x1[:, :h] + x2[:, h:], x1[:, h:] + x2[:, :h]], axis=1)


if __name__ == "__main__":
    key = jax.random.PRNGKey(0)
    kx, kw = jax.random.split(key)

    N, C, H, W = 2, 32, 16, 16          # C >= group_num (16), NCHW like PyTorch
    x = jax.random.normal(kx, (N, C, H, W), dtype=jnp.float32)

    # deterministic parameter init matching GroupBatchnorm2d.__init__:
    #   weight ~ randn(C,1,1), bias = zeros(C,1,1)
    weight = jax.random.normal(kw, (C, 1, 1), dtype=jnp.float32)
    bias = jnp.zeros((C, 1, 1), dtype=jnp.float32)

    out = sru_forward(x, weight, bias, group_num=16, gate_threshold=0.5)
    out = jax.block_until_ready(out)

    ref = sru_reference(x, weight, bias, group_num=16, gate_threshold=0.5)
    assert out.shape == (N, C, H, W)
    assert jnp.allclose(out, ref, atol=1e-5, rtol=1e-5), "mismatch vs reference"

    print("KERNEL_OK")
</pallas_src>

<mosaic_0001>
module attributes {stable_mosaic.version = 11 : i64} {
  func.func @sru_kernel(%arg0: i32, %arg1: memref<2x16x512xf32, #tpu.memory_space<vmem>>, %arg2: memref<16x512xf32, #tpu.memory_space<vmem>>, %arg3: memref<16x512xf32, #tpu.memory_space<vmem>>, %arg4: memref<16x512xf32, #tpu.memory_space<vmem>>, %arg5: memref<2x16x512xf32, #tpu.memory_space<vmem>>) attributes {dimension_semantics = [#tpu.dimension_semantics<parallel>], iteration_bounds = array<i64: 1>, scalar_prefetch = 0 : i64, scratch_operands = 0 : i64, tpu.core_type = #tpu.core_type<tc>, window_params = [{transform_indices = @transform_0, window_bounds = array<i64: 2, 16, 512>}, {pipeline_mode = #tpu.pipeline_mode<synchronous>, transform_indices = @transform_1, window_bounds = array<i64: 16, 512>}, {pipeline_mode = #tpu.pipeline_mode<synchronous>, transform_indices = @transform_2, window_bounds = array<i64: 16, 512>}, {pipeline_mode = #tpu.pipeline_mode<synchronous>, transform_indices = @transform_3, window_bounds = array<i64: 16, 512>}, {transform_indices = @transform_4, window_bounds = array<i64: 2, 16, 512>}]} {
    %c0 = arith.constant 0 : index
    %c0_0 = arith.constant 0 : index
    %c0_1 = arith.constant 0 : index
    %0 = vector.load %arg1[%c0, %c0_0, %c0_1] : memref<2x16x512xf32, #tpu.memory_space<vmem>>, vector<2x16x512xf32>
    %cst = arith.constant dense<0.000000e+00> : vector<2x16xf32>
    %1 = vector.multi_reduction <add>, %0, %cst [2] : vector<2x16x512xf32> to vector<2x16xf32>
    %2 = vector.shape_cast %1 : vector<2x16xf32> to vector<2x16x1xf32>
    %cst_2 = arith.constant 0.001953125 : f32
    %3 = vector.broadcast %cst_2 : f32 to vector<2x16x1xf32>
    %4 = arith.mulf %2, %3 : vector<2x16x1xf32>
    %5 = vector.broadcast %4 : vector<2x16x1xf32> to vector<2x16x512xf32>
    %6 = arith.subf %0, %5 : vector<2x16x512xf32>
    %7 = arith.mulf %6, %6 : vector<2x16x512xf32>
    %cst_3 = arith.constant dense<0.000000e+00> : vector<2x16xf32>
    %8 = vector.multi_reduction <add>, %7, %cst_3 [2] : vector<2x16x512xf32> to vector<2x16xf32>
    %9 = vector.shape_cast %8 : vector<2x16xf32> to vector<2x16x1xf32>
    %cst_4 = arith.constant 0.00195694715 : f32
    %10 = vector.broadcast %cst_4 : f32 to vector<2x16x1xf32>
    %11 = arith.mulf %9, %10 : vector<2x16x1xf32>
    %12 = math.sqrt %11 : vector<2x16x1xf32>
    %cst_5 = arith.constant 1.000000e-10 : f32
    %13 = vector.broadcast %cst_5 : f32 to vector<2x16x1xf32>
    %14 = arith.addf %12, %13 : vector<2x16x1xf32>
    %cst_6 = arith.constant 1.000000e+00 : f32
    %15 = vector.broadcast %cst_6 : f32 to vector<2x16x1xf32>
    %16 = arith.divf %15, %14 : vector<2x16x1xf32>
    %17 = vector.broadcast %16 : vector<2x16x1xf32> to vector<2x16x512xf32>
    %18 = arith.mulf %6, %17 : vector<2x16x512xf32>
    %c0_7 = arith.constant 0 : index
    %c0_8 = arith.constant 0 : index
    %19 = vector.load %arg2[%c0_7, %c0_8] : memref<16x512xf32, #tpu.memory_space<vmem>>, vector<16x512xf32>
    %20 = vector.shape_cast %19 : vector<16x512xf32> to vector<1x16x512xf32>
    %21 = vector.broadcast %20 : vector<1x16x512xf32> to vector<2x16x512xf32>
    %22 = arith.mulf %18, %21 : vector<2x16x512xf32>
    %c0_9 = arith.constant 0 : index
    %c0_10 = arith.constant 0 : index
    %23 = vector.load %arg3[%c0_9, %c0_10] : memref<16x512xf32, #tpu.memory_space<vmem>>, vector<16x512xf32>
    %24 = vector.shape_cast %23 : vector<16x512xf32> to vector<1x16x512xf32>
    %25 = vector.broadcast %24 : vector<1x16x512xf32> to vector<2x16x512xf32>
    %26 = arith.addf %22, %25 : vector<2x16x512xf32>
    %c0_11 = arith.constant 0 : index
    %c0_12 = arith.constant 0 : index
    %27 = vector.load %arg4[%c0_11, %c0_12] : memref<16x512xf32, #tpu.memory_space<vmem>>, vector<16x512xf32>
    %28 = vector.shape_cast %27 : vector<16x512xf32> to vector<1x16x512xf32>
    %29 = vector.broadcast %28 : vector<1x16x512xf32> to vector<2x16x512xf32>
    %30 = arith.mulf %26, %29 : vector<2x16x512xf32>
    %cst_13 = arith.constant 0.000000e+00 : f32
    %31 = vector.broadcast %cst_13 : f32 to vector<2x16x512xf32>
    %32 = arith.cmpf oge, %30, %31 : vector<2x16x512xf32>
    %cst_14 = arith.constant 0.000000e+00 : f32
    %33 = vector.broadcast %cst_14 : f32 to vector<2x16x512xf32>
    %34 = arith.select %32, %26, %33 : vector<2x16x512xi1>, vector<2x16x512xf32>
    %cst_15 = arith.constant 0.000000e+00 : f32
    %35 = vector.broadcast %cst_15 : f32 to vector<2x16x512xf32>
    %36 = arith.select %32, %35, %26 : vector<2x16x512xi1>, vector<2x16x512xf32>
    %37 = vector.extract_strided_slice %36 {offsets = [0, 8, 0], sizes = [2, 8, 512], strides = [1, 1, 1]} : vector<2x16x512xf32> to vector<2x8x512xf32>
    %38 = vector.extract_strided_slice %36 {offsets = [0, 0, 0], sizes = [2, 8, 512], strides = [1, 1, 1]} : vector<2x16x512xf32> to vector<2x8x512xf32>
    %39 = tpu.concatenate %37, %38 in 1 : vector<2x8x512xf32>, vector<2x8x512xf32> -> vector<2x16x512xf32>
    %40 = arith.addf %34, %39 : vector<2x16x512xf32>
    %c0_16 = arith.constant 0 : index
    %c0_17 = arith.constant 0 : index
    %c0_18 = arith.constant 0 : index
    %41 = vector.load %arg5[%c0_16, %c0_17, %c0_18] : memref<2x16x512xf32, #tpu.memory_space<vmem>>, vector<2x16x512xf32>
    tpu.vector_store %arg5[%c0_16, %c0_17, %c0_18], %40 {strides = array<i32>} : memref<2x16x512xf32, #tpu.memory_space<vmem>>, vector<2x16x512xf32>,
    return
  }
  func.func @transform_0(%arg0: i32) -> (i32, i32, i32) {
    %c0_i32 = arith.constant 0 : i32
    %c0_i32_0 = arith.constant 0 : i32
    %c0_i32_1 = arith.constant 0 : i32
    return %arg0, %c0_i32, %c0_i32_0 : i32, i32, i32
  }
  func.func @transform_1(%arg0: i32) -> (i32, i32) {
    %c0_i32 = arith.constant 0 : i32
    %c0_i32_0 = arith.constant 0 : i32
    %c0_i32_1 = arith.constant 0 : i32
    return %c0_i32, %c0_i32_0 : i32, i32
  }
  func.func @transform_2(%arg0: i32) -> (i32, i32) {
    %c0_i32 = arith.constant 0 : i32
    %c0_i32_0 = arith.constant 0 : i32
    %c0_i32_1 = arith.constant 0 : i32
    return %c0_i32, %c0_i32_0 : i32, i32
  }
  func.func @transform_3(%arg0: i32) -> (i32, i32) {
    %c0_i32 = arith.constant 0 : i32
    %c0_i32_0 = arith.constant 0 : i32
    %c0_i32_1 = arith.constant 0 : i32
    return %c0_i32, %c0_i32_0 : i32, i32
  }
  func.func @transform_4(%arg0: i32) -> (i32, i32, i32) {
    %c0_i32 = arith.constant 0 : i32
    %c0_i32_0 = arith.constant 0 : i32
    %c0_i32_1 = arith.constant 0 : i32
    return %arg0, %c0_i32, %c0_i32_0 : i32, i32, i32
  }
}

</mosaic_0001>

<llo_original>
// kernel: tpu_custom_call.1
$region0: #{tpu_custom_call.1}
  #allocation0 [shape = 'u32[]', space=smem, size = 0x4, offset = 0x4, fixed_abs, tag = 'smem constant byte address 0x4 - core index']
  #allocation1 [shape = 'u32[144,128]{1,0:T(1,128)}', space=vmem, size = 0x12000, scoped, tag = 'internal scratch']
  %s0 = inlined_call_operand.hbm [shape: f32[2,16,512], index: 0, kind: input, shape index: {}]
  %s1 = inlined_call_operand.hbm [shape: f32[16,512], index: 1, kind: input, shape index: {}]
  %s2 = inlined_call_operand.hbm [shape: f32[16,512], index: 2, kind: input, shape index: {}]
  %s3 = inlined_call_operand.hbm [shape: f32[16,512], index: 3, kind: input, shape index: {}]
  %s4 = inlined_call_operand.hbm [shape: f32[2,16,512], index: 4, kind: output, shape index: {}]
  %s5 = sld [smem:[#allocation0]]
  $region42: #{tpu_custom_call.1} parent=0
    _
  %s7 = ssub.s32 1, %s5
  %s8 = scalar_select 0, %s7, %s5
  $region1: #{tpu_custom_call.1} parent=0
    #allocation2 [shape = 'u8[65536]{0}', space=vmem, size = 0x10000, scoped, tag = 'input window, operand 0, single buffered']
    #allocation3 [shape = 's32[1]{0}', space=sflag, size = 0x4, scoped, tag = 'scoped memory for tpu_custom_call.1']
    #allocation4 [shape = 's32[1]{0}', space=sflag, size = 0x4, scoped, tag = 'scoped memory for tpu_custom_call.1']
    #allocation5 [shape = 'u8[32768]{0}', space=vmem, size = 0x8000, scoped, tag = 'input window, operand 1, single buffered']
    #allocation6 [shape = 's32[1]{0}', space=sflag, size = 0x4, scoped, tag = 'scoped memory for tpu_custom_call.1']
    #allocation7 [shape = 'u8[32768]{0}', space=vmem, size = 0x8000, scoped, tag = 'input window, operand 2, single buffered']
    #allocation8 [shape = 'u8[32768]{0}', space=vmem, size = 0x8000, scoped, tag = 'input window, operand 3, single buffered']
    #allocation9 [shape = 's32[1]{0}', space=sflag, size = 0x4, scoped, tag = 'scoped memory for tpu_custom_call.1']
    #allocation10 [shape = 'u8[65536]{0}', space=vmem, size = 0x10000, scoped, tag = 'output window, operand 0, single buffered']
    %9 = vsyncpa [#allocation3], 0
    %10 = vsyncpa [#allocation6], 0
    %11 = vsyncpa [#allocation9], 0
    %12 = vsyncpa [#allocation4], 0
    // Predicated region
    $region2: #{tpu_custom_call.1} parent=1 // pred_check
      _
    $region3: #{tpu_custom_call.1} parent=1 // pred_check_branch
      %14 = sbr.rel (0) target = $region5
    $region4: #{tpu_custom_call.1} parent=1 // pred_region
      %s16 = ssub.s32 2048, 2048
      %17 = vsyncadd [#allocation3], %s16
      %s18 = sshll.u32 [#allocation2], 4
      %s19 = int_to_ptr.vmem [resolvable:$true] %s18
      %24 = dma.hbm_to_vmem [thread:$0]  %s0, 2048, %s19, [#allocation3], 512, 512, 32
    $region5: #{tpu_custom_call.1} parent=1 // pred_fallthru
      _
    // Predicated region
    $region6: #{tpu_custom_call.1} parent=1 // pred_check
      _
    $region7: #{tpu_custom_call.1} parent=1 // pred_check_branch
      %26 = sbr.rel (0) target = $region9
    $region8: #{tpu_custom_call.1} parent=1 // pred_region
      %s28 = ssub.s32 1024, 1024
      %29 = vsyncadd [#allocation6], %s28
      %s30 = sshll.u32 [#allocation5], 4
      %s31 = int_to_ptr.vmem [resolvable:$true] %s30
      %36 = dma.hbm_to_vmem [thread:$0]  %s1, 1024, %s31, [#allocation6], 512, 512, 32
    $region9: #{tpu_custom_call.1} parent=1 // pred_fallthru
      _
    // Predicated region
    $region10: #{tpu_custom_call.1} parent=1 // pred_check
      _
    $region11: #{tpu_custom_call.1} parent=1 // pred_check_branch
      %38 = sbr.rel (0) target = $region13
    $region12: #{tpu_custom_call.1} parent=1 // pred_region
      %s40 = ssub.s32 1024, 1024
      %41 = vsyncadd [#allocation6], %s40
      %s42 = sshll.u32 [#allocation7], 4
      %s43 = int_to_ptr.vmem [resolvable:$true] %s42
      %48 = dma.hbm_to_vmem [thread:$0]  %s2, 1024, %s43, [#allocation6], 512, 512, 32
    $region13: #{tpu_custom_call.1} parent=1 // pred_fallthru
      _
    // Predicated region
    $region14: #{tpu_custom_call.1} parent=1 // pred_check
      _
    $region15: #{tpu_custom_call.1} parent=1 // pred_check_branch
      %50 = sbr.rel (0) target = $region17
    $region16: #{tpu_custom_call.1} parent=1 // pred_region
      %s52 = ssub.s32 1024, 1024
      %53 = vsyncadd [#allocation9], %s52
      %s54 = sshll.u32 [#allocation8], 4
      %s55 = int_to_ptr.vmem [resolvable:$true] %s54
      %60 = dma.hbm_to_vmem [thread:$0]  %s3, 1024, %s55, [#allocation9], 512, 512, 32
    $region17: #{tpu_custom_call.1} parent=1 // pred_fallthru
      _
    // Predicated region
    $region18: #{tpu_custom_call.1} parent=1 // pred_check
      _
    $region19: #{tpu_custom_call.1} parent=1 // pred_check_branch
      %62 = sbr.rel (0) target = $region21
    $region20: #{tpu_custom_call.1} parent=1 // pred_region
      %63 = dma.done [#allocation3], 2048
    $region21: #{tpu_custom_call.1} parent=1 // pred_fallthru
      _
    // Predicated region
    $region22: #{tpu_custom_call.1} parent=1 // pred_check
      _
    $region23: #{tpu_custom_call.1} parent=1 // pred_check_branch
      %65 = sbr.rel (0) target = $region25
    $region24: #{tpu_custom_call.1} parent=1 // pred_region
      %66 = dma.done [#allocation6], 1024
    $region25: #{tpu_custom_call.1} parent=1 // pred_fallthru
      _
    // Predicated region
    $region26: #{tpu_custom_call.1} parent=1 // pred_check
      _
    $region27: #{tpu_custom_call.1} parent=1 // pred_check_branch
      %68 = sbr.rel (0) target = $region29
    $region28: #{tpu_custom_call.1} parent=1 // pred_region
      %69 = dma.done [#allocation6], 1024
    $region29: #{tpu_custom_call.1} parent=1 // pred_fallthru
      _
    // Predicated region
    $region30: #{tpu_custom_call.1} parent=1 // pred_check
      _
    $region31: #{tpu_custom_call.1} parent=1 // pred_check_branch
      %71 = sbr.rel (0) target = $region33
    $region32: #{tpu_custom_call.1} parent=1 // pred_region
      %72 = dma.done [#allocation9], 1024
    $region33: #{tpu_custom_call.1} parent=1 // pred_fallthru
      _
    %v73 = vld [vmem:[#allocation2] sm:$0xff]
    %v74 = vld [vmem:[#allocation2 + $0x8] sm:$0xff]
    %v75 = vld [vmem:[#allocation2 + $0x10] sm:$0xff]
    %v76 = vld [vmem:[#allocation2 + $0x18] sm:$0xff]
    %v77 = vld [vmem:[#allocation2 + $0x20] sm:$0xff]
    %v78 = vld [vmem:[#allocation2 + $0x28] sm:$0xff]
    %v79 = vld [vmem:[#allocation2 + $0x30] sm:$0xff]
    %v80 = vld [vmem:[#allocation2 + $0x38] sm:$0xff]
    %v81 = vld [vmem:[#allocation2 + $0x40] sm:$0xff]
    %v82 = vld [vmem:[#allocation2 + $0x48] sm:$0xff]
    %v83 = vld [vmem:[#allocation2 + $0x50] sm:$0xff]
    %v84 = vld [vmem:[#allocation2 + $0x58] sm:$0xff]
    %v85 = vld [vmem:[#allocation2 + $0x60] sm:$0xff]
    %v86 = vld [vmem:[#allocation2 + $0x68] sm:$0xff]
    %v87 = vld [vmem:[#allocation2 + $0x70] sm:$0xff]
    %v88 = vld [vmem:[#allocation2 + $0x78] sm:$0xff]
    %v89 = vadd.f32 %v73, %v74
    %v90 = vadd.f32 %v89, %v75
    %v91 = vadd.f32 %v90, %v76
    %92 = vadd.xlane.f32.xlu0 %v91
    %v93 = vpop.xlane.xlu0 %92
    %v94 = vadd.f32 %v77, %v78
    %v95 = vadd.f32 %v94, %v79
    %v96 = vadd.f32 %v95, %v80
    %97 = vadd.xlane.f32.xlu0 %v96
    %v98 = vpop.xlane.xlu0 %97
    %v99 = vadd.f32 %v81, %v82
    %v100 = vadd.f32 %v99, %v83
    %v101 = vadd.f32 %v100, %v84
    %102 = vadd.xlane.f32.xlu0 %v101
    %v103 = vpop.xlane.xlu0 %102
    %v104 = vadd.f32 %v85, %v86
    %v105 = vadd.f32 %v104, %v87
    %v106 = vadd.f32 %v105, %v88
    %107 = vadd.xlane.f32.xlu0 %v106
    %v108 = vpop.xlane.xlu0 %107
    %v109 = vmul.f32 %v93, 0.001953125
    %v110 = vmul.f32 %v98, 0.001953125
    %v111 = vmul.f32 %v103, 0.001953125
    %v112 = vmul.f32 %v108, 0.001953125
    %v113 = vsub.f32 %v73, %v109
    %v114 = vsub.f32 %v74, %v109
    %v115 = vsub.f32 %v75, %v109
    %v116 = vsub.f32 %v76, %v109
    %v117 = vsub.f32 %v77, %v110
    %v118 = vsub.f32 %v78, %v110
    %v119 = vsub.f32 %v79, %v110
    %v120 = vsub.f32 %v80, %v110
    %v121 = vsub.f32 %v81, %v111
    %v122 = vsub.f32 %v82, %v111
    %v123 = vsub.f32 %v83, %v111
    %v124 = vsub.f32 %v84, %v111
    %v125 = vsub.f32 %v85, %v112
    %v126 = vsub.f32 %v86, %v112
    %v127 = vsub.f32 %v87, %v112
    %v128 = vsub.f32 %v88, %v112
    %v129 = vmul.f32 %v113, %v113
    %v130 = vmul.f32 %v114, %v114
    %v131 = vmul.f32 %v115, %v115
    %v132 = vmul.f32 %v116, %v116
    %v133 = vmul.f32 %v117, %v117
    %v134 = vmul.f32 %v118, %v118
    %v135 = vmul.f32 %v119, %v119
    %v136 = vmul.f32 %v120, %v120
    %v137 = vmul.f32 %v121, %v121
    %v138 = vmul.f32 %v122, %v122
    %v139 = vmul.f32 %v123, %v123
    %v140 = vmul.f32 %v124, %v124
    %v141 = vmul.f32 %v125, %v125
    %v142 = vmul.f32 %v126, %v126
    %v143 = vmul.f32 %v127, %v127
    %v144 = vmul.f32 %v128, %v128
    %v145 = vadd.f32 %v129, %v130
    %v146 = vadd.f32 %v145, %v131
    %v147 = vadd.f32 %v146, %v132
    %148 = vadd.xlane.f32.xlu0 %v147
    %v149 = vpop.xlane.xlu0 %148
    %v150 = vadd.f32 %v133, %v134
    %v151 = vadd.f32 %v150, %v135
    %v152 = vadd.f32 %v151, %v136
    %153 = vadd.xlane.f32.xlu0 %v152
    %v154 = vpop.xlane.xlu0 %153
    %v155 = vadd.f32 %v137, %v138
    %v156 = vadd.f32 %v155, %v139
    %v157 = vadd.f32 %v156, %v140
    %158 = vadd.xlane.f32.xlu0 %v157
    %v159 = vpop.xlane.xlu0 %158
    %v160 = vadd.f32 %v141, %v142
    %v161 = vadd.f32 %v160, %v143
    %v162 = vadd.f32 %v161, %v144
    %163 = vadd.xlane.f32.xlu0 %v162
    %v164 = vpop.xlane.xlu0 %163
    %v165 = vmul.f32 %v149, 0.0019569471
    %v166 = vmul.f32 %v154, 0.0019569471
    %v167 = vmul.f32 %v159, 0.0019569471
    %v168 = vmul.f32 %v164, 0.0019569471
    %v169 = vrsqrt.pop %v165
    %v170 = vmul.f32 %v165, %v169
    %vm171 = vcmp.eq.f32.partialorder %v165, inf
    %v172 = vsel %vm171, %v165, %v170
    %vm173 = vcmp.eq.f32.partialorder %v165, 0.0
    %v174 = vand.u32 %v165, 2147483648
    %v175 = vsel %vm173, %v174, %v172
    %v176 = vrsqrt.pop %v166
    %v177 = vmul.f32 %v166, %v176
    %vm178 = vcmp.eq.f32.partialorder %v166, inf
    %v179 = vsel %vm178, %v166, %v177
    %vm180 = vcmp.eq.f32.partialorder %v166, 0.0
    %v181 = vand.u32 %v166, 2147483648
    %v182 = vsel %vm180, %v181, %v179
    %v183 = vrsqrt.pop %v167
    %v184 = vmul.f32 %v167, %v183
    %vm185 = vcmp.eq.f32.partialorder %v167, inf
    %v186 = vsel %vm185, %v167, %v184
    %vm187 = vcmp.eq.f32.partialorder %v167, 0.0
    %v188 = vand.u32 %v167, 2147483648
    %v189 = vsel %vm187, %v188, %v186
    %v190 = vrsqrt.pop %v168
    %v191 = vmul.f32 %v168, %v190
    %vm192 = vcmp.eq.f32.partialorder %v168, inf
    %v193 = vsel %vm192, %v168, %v191
    %vm194 = vcmp.eq.f32.partialorder %v168, 0.0
    %v195 = vand.u32 %v168, 2147483648
    %v196 = vsel %vm194, %v195, %v193
    %v197 = vadd.f32 %v175, 1e-10
    %v198 = vadd.f32 %v182, 1e-10
    %v199 = vadd.f32 %v189, 1e-10
    %v200 = vadd.f32 %v196, 1e-10
    %v201 = vrcp.pop %v197
    %v202 = vmul.f32 1.0, %v201
    %v203 = vrcp.pop %v198
    %v204 = vmul.f32 1.0, %v203
    %v205 = vrcp.pop %v199
    %v206 = vmul.f32 1.0, %v205
    %v207 = vrcp.pop %v200
    %v208 = vmul.f32 1.0, %v207
    %v209 = vmul.f32 %v113, %v202
    %v210 = vmul.f32 %v114, %v202
    %v211 = vmul.f32 %v115, %v202
    %v212 = vmul.f32 %v116, %v202
    %v213 = vmul.f32 %v117, %v204
    %v214 = vmul.f32 %v118, %v204
    %v215 = vmul.f32 %v119, %v204
    %v216 = vmul.f32 %v120, %v204
    %v217 = vmul.f32 %v121, %v206
    %v218 = vmul.f32 %v122, %v206
    %v219 = vmul.f32 %v123, %v206
    %v220 = vmul.f32 %v124, %v206
    %v221 = vmul.f32 %v125, %v208
    %v222 = vmul.f32 %v126, %v208
    %v223 = vmul.f32 %v127, %v208
    %v224 = vmul.f32 %v128, %v208
    %v225 = vld [vmem:[#allocation5] sm:$0xff]
    %v226 = vld [vmem:[#allocation5 + $0x8] sm:$0xff]
    %v227 = vld [vmem:[#allocation5 + $0x10] sm:$0xff]
    %v228 = vld [vmem:[#allocation5 + $0x18] sm:$0xff]
    %v229 = vld [vmem:[#allocation5 + $0x20] sm:$0xff]
    %v230 = vld [vmem:[#allocation5 + $0x28] sm:$0xff]
    %v231 = vld [vmem:[#allocation5 + $0x30] sm:$0xff]
    %v232 = vld [vmem:[#allocation5 + $0x38] sm:$0xff]
    %v233 = vmul.f32 %v209, %v225
    %v234 = vmul.f32 %v210, %v226
    %v235 = vmul.f32 %v211, %v227
    %v236 = vmul.f32 %v212, %v228
    %v237 = vmul.f32 %v213, %v229
    %v238 = vmul.f32 %v214, %v230
    %v239 = vmul.f32 %v215, %v231
    %v240 = vmul.f32 %v216, %v232
    %v241 = vmul.f32 %v217, %v225
    %v242 = vmul.f32 %v218, %v226
    %v243 = vmul.f32 %v219, %v227
    %v244 = vmul.f32 %v220, %v228
    %v245 = vmul.f32 %v221, %v229
    %v246 = vmul.f32 %v222, %v230
    %v247 = vmul.f32 %v223, %v231
    %v248 = vmul.f32 %v224, %v232
    %v249 = vld [vmem:[#allocation7] sm:$0xff]
    %v250 = vld [vmem:[#allocation7 + $0x8] sm:$0xff]
    %v251 = vld [vmem:[#allocation7 + $0x10] sm:$0xff]
    %v252 = vld [vmem:[#allocation7 + $0x18] sm:$0xff]
    %v253 = vld [vmem:[#allocation7 + $0x20] sm:$0xff]
    %v254 = vld [vmem:[#allocation7 + $0x28] sm:$0xff]
    %v255 = vld [vmem:[#allocation7 + $0x30] sm:$0xff]
    %v256 = vld [vmem:[#allocation7 + $0x38] sm:$0xff]
    %v257 = vadd.f32 %v233, %v249
    %v258 = vadd.f32 %v234, %v250
    %v259 = vadd.f32 %v235, %v251
    %v260 = vadd.f32 %v236, %v252
    %v261 = vadd.f32 %v237, %v253
    %v262 = vadd.f32 %v238, %v254
    %v263 = vadd.f32 %v239, %v255
    %v264 = vadd.f32 %v240, %v256
    %v265 = vadd.f32 %v241, %v249
    %v266 = vadd.f32 %v242, %v250
    %v267 = vadd.f32 %v243, %v251
    %v268 = vadd.f32 %v244, %v252
    %v269 = vadd.f32 %v245, %v253
    %v270 = vadd.f32 %v246, %v254
    %v271 = vadd.f32 %v247, %v255
    %v272 = vadd.f32 %v248, %v256
    %v273 = vld [vmem:[#allocation8] sm:$0xff]
    %v274 = vld [vmem:[#allocation8 + $0x8] sm:$0xff]
    %v275 = vld [vmem:[#allocation8 + $0x10] sm:$0xff]
    %v276 = vld [vmem:[#allocation8 + $0x18] sm:$0xff]
    %v277 = vld [vmem:[#allocation8 + $0x20] sm:$0xff]
    %v278 = vld [vmem:[#allocation8 + $0x28] sm:$0xff]
    %v279 = vld [vmem:[#allocation8 + $0x30] sm:$0xff]
    %v280 = vld [vmem:[#allocation8 + $0x38] sm:$0xff]
    %v281 = vmul.f32 %v257, %v273
    %v282 = vmul.f32 %v258, %v274
    %v283 = vmul.f32 %v259, %v275
    %v284 = vmul.f32 %v260, %v276
    %v285 = vmul.f32 %v261, %v277
    %v286 = vmul.f32 %v262, %v278
    %v287 = vmul.f32 %v263, %v279
    %v288 = vmul.f32 %v264, %v280
    %v289 = vmul.f32 %v265, %v273
    %v290 = vmul.f32 %v266, %v274
    %v291 = vmul.f32 %v267, %v275
    %v292 = vmul.f32 %v268, %v276
    %v293 = vmul.f32 %v269, %v277
    %v294 = vmul.f32 %v270, %v278
    %v295 = vmul.f32 %v271, %v279
    %v296 = vmul.f32 %v272, %v280
    %vm297 = vcmp.ge.f32.partialorder %v281, 0.0
    %vm298 = vcmp.ge.f32.partialorder %v282, 0.0
    %vm299 = vcmp.ge.f32.partialorder %v283, 0.0
    %vm300 = vcmp.ge.f32.partialorder %v284, 0.0
    %vm301 = vcmp.ge.f32.partialorder %v285, 0.0
    %vm302 = vcmp.ge.f32.partialorder %v286, 0.0
    %vm303 = vcmp.ge.f32.partialorder %v287, 0.0
    %vm304 = vcmp.ge.f32.partialorder %v288, 0.0
    %vm305 = vcmp.ge.f32.partialorder %v289, 0.0
    %vm306 = vcmp.ge.f32.partialorder %v290, 0.0
    %vm307 = vcmp.ge.f32.partialorder %v291, 0.0
    %vm308 = vcmp.ge.f32.partialorder %v292, 0.0
    %vm309 = vcmp.ge.f32.partialorder %v293, 0.0
    %vm310 = vcmp.ge.f32.partialorder %v294, 0.0
    %vm311 = vcmp.ge.f32.partialorder %v295, 0.0
    %vm312 = vcmp.ge.f32.partialorder %v296, 0.0
    %v313 = vsel %vm297, %v257, 0.0
    %v314 = vsel %vm298, %v258, 0.0
    %v315 = vsel %vm299, %v259, 0.0
    %v316 = vsel %vm300, %v260, 0.0
    %v317 = vsel %vm301, %v261, 0.0
    %v318 = vsel %vm302, %v262, 0.0
    %v319 = vsel %vm303, %v263, 0.0
    %v320 = vsel %vm304, %v264, 0.0
    %v321 = vsel %vm305, %v265, 0.0
    %v322 = vsel %vm306, %v266, 0.0
    %v323 = vsel %vm307, %v267, 0.0
    %v324 = vsel %vm308, %v268, 0.0
    %v325 = vsel %vm309, %v269, 0.0
    %v326 = vsel %vm310, %v270, 0.0
    %v327 = vsel %vm311, %v271, 0.0
    %v328 = vsel %vm312, %v272, 0.0
    %v329 = vsel %vm297, 0.0, %v257
    %v330 = vsel %vm298, 0.0, %v258
    %v331 = vsel %vm299, 0.0, %v259
    %v332 = vsel %vm300, 0.0, %v260
    %v333 = vsel %vm301, 0.0, %v261
    %v334 = vsel %vm302, 0.0, %v262
    %v335 = vsel %vm303, 0.0, %v263
    %v336 = vsel %vm304, 0.0, %v264
    %v337 = vsel %vm305, 0.0, %v265
    %v338 = vsel %vm306, 0.0, %v266
    %v339 = vsel %vm307, 0.0, %v267
    %v340 = vsel %vm308, 0.0, %v268
    %v341 = vsel %vm309, 0.0, %v269
    %v342 = vsel %vm310, 0.0, %v270
    %v343 = vsel %vm311, 0.0, %v271
    %v344 = vsel %vm312, 0.0, %v272
    %v345 = vadd.f32 %v313, %v333
    %v346 = vadd.f32 %v314, %v334
    %v347 = vadd.f32 %v315, %v335
    %v348 = vadd.f32 %v316, %v336
    %v349 = vadd.f32 %v317, %v329
    %v350 = vadd.f32 %v318, %v330
    %v351 = vadd.f32 %v319, %v331
    %v352 = vadd.f32 %v320, %v332
    %v353 = vadd.f32 %v321, %v341
    %v354 = vadd.f32 %v322, %v342
    %v355 = vadd.f32 %v323, %v343
    %v356 = vadd.f32 %v324, %v344
    %v357 = vadd.f32 %v325, %v337
    %v358 = vadd.f32 %v326, %v338
    %v359 = vadd.f32 %v327, %v339
    %v360 = vadd.f32 %v328, %v340
    %361 = vst [vmem:[#allocation10] sm:$0xff] %v345
    %362 = vst [vmem:[#allocation10 + $0x8] sm:$0xff] %v346
    %363 = vst [vmem:[#allocation10 + $0x10] sm:$0xff] %v347
    %364 = vst [vmem:[#allocation10 + $0x18] sm:$0xff] %v348
    %365 = vst [vmem:[#allocation10 + $0x20] sm:$0xff] %v349
    %366 = vst [vmem:[#allocation10 + $0x28] sm:$0xff] %v350
    %367 = vst [vmem:[#allocation10 + $0x30] sm:$0xff] %v351
    %368 = vst [vmem:[#allocation10 + $0x38] sm:$0xff] %v352
    %369 = vst [vmem:[#allocation10 + $0x40] sm:$0xff] %v353
    %370 = vst [vmem:[#allocation10 + $0x48] sm:$0xff] %v354
    %371 = vst [vmem:[#allocation10 + $0x50] sm:$0xff] %v355
    %372 = vst [vmem:[#allocation10 + $0x58] sm:$0xff] %v356
    %373 = vst [vmem:[#allocation10 + $0x60] sm:$0xff] %v357
    %374 = vst [vmem:[#allocation10 + $0x68] sm:$0xff] %v358
    %375 = vst [vmem:[#allocation10 + $0x70] sm:$0xff] %v359
    %376 = vst [vmem:[#allocation10 + $0x78] sm:$0xff] %v360
    // Predicated region
    $region34: #{tpu_custom_call.1} parent=1 // pred_check
      _
    $region35: #{tpu_custom_call.1} parent=1 // pred_check_branch
      %378 = sbr.rel (0) target = $region37
    $region36: #{tpu_custom_call.1} parent=1 // pred_region
      %s380 = ssub.s32 2048, 2048
      %381 = vsyncadd [#allocation4], %s380
      %s382 = sshll.u32 [#allocation10], 4
      %s383 = int_to_ptr.vmem [resolvable:$true] %s382
      %388 = dma.vmem_to_hbm [thread:$0]  %s383, 2048, %s4, [#allocation4], 512, 512, 32
    $region37: #{tpu_custom_call.1} parent=1 // pred_fallthru
      _
    // Predicated region
    $region38: #{tpu_custom_call.1} parent=1 // pred_check
      _
    $region39: #{tpu_custom_call.1} parent=1 // pred_check_branch
      %390 = sbr.rel (0) target = $region41
    $region40: #{tpu_custom_call.1} parent=1 // pred_region
      %391 = dma.done [#allocation4], 2048
    $region41: #{tpu_custom_call.1} parent=1 // pred_fallthru
      _
    %392 = vsyncpa [#allocation3], 1
    %393 = vsyncpa [#allocation6], 1
    %394 = vsyncpa [#allocation9], 1
    %395 = vsyncpa [#allocation4], 1

</llo_original>
